<compile_context>
chip_gen: v5e
topology: v5e:2x2
jax: 0.10.0
libtpu: 0.0.40
codegen_flags: <defaults>
</compile_context>

<pallas_src>
import jax
import jax.numpy as jnp
from jax import lax
from jax.experimental import pallas as pl
from jax.experimental.pallas import tpu as pltpu


def _round_up(v, m):
    return ((v + m - 1) // m) * m


def _pick_tk(d_pad, tk_max):
    """Largest multiple of 128 <= tk_max that divides d_pad (d_pad is a mult of 128)."""
    if d_pad <= tk_max:
        return d_pad
    tk = (tk_max // 128) * 128
    while tk >= 128:
        if d_pad % tk == 0:
            return tk
        tk -= 128
    return 128


# ----------------------------- Pallas kernel -------------------------------

def lucir_fused_kernel(x_ref, wb_ref, bb_ref, wct_ref, o_ref, acc_ref):
    """Fused backbone (linear+bias+ReLU) + CosineLinear forward.

    Grid: (batch tiles [parallel], K tiles over flattened input [arbitrary]).

    x:   [BN, TK]          input tile (mxu dtype)
    wb:  [TK, F_pad]       backbone weight K-slice (mxu dtype)
    bb:  [1,  F_pad]       backbone bias (f32)
    wct: [F_pad, C_pad]    pre-normalized, sigma-scaled classifier weight^T (mxu dtype)
    o:   [BN, C_pad]       logits tile (f32)
    acc: [BN, F_pad]       f32 feature accumulator (VMEM scratch)
    """
    k = pl.program_id(1)

    @pl.when(k == 0)
    def _init():
        acc_ref[...] = jnp.zeros_like(acc_ref)

    # Backbone partial matmul on the MXU, f32 accumulation.
    acc_ref[...] += jnp.dot(x_ref[...], wb_ref[...],
                            preferred_element_type=jnp.float32)

    @pl.when(k == pl.num_programs(1) - 1)
    def _finalize():
        # Bias + ReLU in f32.  (Padded batch rows get relu(bias) garbage; they
        # are discarded by the wrapper slice out[:n].)
        feat = jnp.maximum(acc_ref[...] + bb_ref[...], 0.0)

        # Raw logits: classifier weight already carries sigma / ||w|| per column,
        # so only the feature-side normalization remains in-kernel.
        wct = wct_ref[...]
        raw = jnp.dot(feat.astype(wct.dtype), wct,
                      preferred_element_type=jnp.float32)

        # F.normalize(feat, eps=1e-12) <=> clamp squared norm at eps^2; rsqrt on
        # the EUP, kept in f32 (no bf16 EUP on v5e).
        f_inv = lax.rsqrt(
            jnp.maximum(jnp.sum(feat * feat, axis=-1, keepdims=True), 1e-24))

        o_ref[...] = raw * f_inv


# --------------------------- Host-side weight prep ---------------------------

def prepare_lucir_params(w_b, b_b, w_c, sigma, *, mxu_dtype=jnp.bfloat16):
    """Build padded / transposed / pre-normalized weights ONCE (amortized)."""
    d_in, feat_dim = w_b.shape
    num_class = w_c.shape[0]

    d_pad = _round_up(d_in, 128)
    f_pad = _round_up(feat_dim, 128)
    c_pad = _round_up(num_class, 128)

    wb_p = jnp.pad(w_b.astype(jnp.float32),
                   ((0, d_pad - d_in), (0, f_pad - feat_dim))).astype(mxu_dtype)
    bb_p = jnp.pad(b_b.reshape(1, feat_dim).astype(jnp.float32),
                   ((0, 0), (0, f_pad - feat_dim)))

    # CosineLinear weight-side normalization + sigma folded in on the host.
    # Computed on the *unpadded* weight so padded columns stay exactly zero.
    w_c32 = w_c.astype(jnp.float32)
    w_norm = jnp.maximum(jnp.linalg.norm(w_c32, axis=1, keepdims=True), 1e-12)
    sigma_s = jnp.asarray(sigma, jnp.float32).reshape(())
    w_scaled = (sigma_s / w_norm) * w_c32                    # [C, F]
    wct_p = jnp.pad(w_scaled.T,                               # pre-transpose -> [F, C]
                    ((0, f_pad - feat_dim), (0, c_pad - num_class))
                    ).astype(mxu_dtype)

    return {
        "wb_p": wb_p, "bb_p": bb_p, "wct_p": wct_p,
        "d_in": d_in, "d_pad": d_pad, "f_pad": f_pad, "c_pad": c_pad,
        "num_class": num_class, "mxu_dtype": mxu_dtype,
    }


# ------------------------------ Forward wrapper ------------------------------

def lucir_forward(x_nchw, prep, *, bn_max=256, tk_max=2048):
    """Model.forward / get_logits: classifier(backbone(x)['features'])."""
    n = x_nchw.shape[0]
    d_in, d_pad = prep["d_in"], prep["d_pad"]
    f_pad, c_pad = prep["f_pad"], prep["c_pad"]
    num_class = prep["num_class"]
    mxu_dtype = prep["mxu_dtype"]

    # Glue: flatten NCHW row-major (== torch x.view(N, -1)) and cast MXU operand.
    x_flat = x_nchw.reshape(n, -1).astype(mxu_dtype)

    # Batch tile: big for large N (fewer grid steps, bigger DMAs), multiple of 8
    # for small N.  n_pad // bn >= 2 when N is large so both v7x cores get work.
    bn = bn_max if n >= bn_max else _round_up(n, 8)
    n_pad = _round_up(n, bn)

    # Only pad when needed (skip the extra HBM round-trip when already aligned).
    pad_rows, pad_cols = n_pad - n, d_pad - d_in
    x_p = jnp.pad(x_flat, ((0, pad_rows), (0, pad_cols))) if (pad_rows or pad_cols) else x_flat

    tk = _pick_tk(d_pad, tk_max)
    grid = (n_pad // bn, d_pad // tk)

    # Explicit scoped-VMEM budget from the actual tile sizes (double-buffered
    # inputs/outputs + f32 accumulator), with margin, clamped to v7x's 64 MiB.
    eb = jnp.dtype(mxu_dtype).itemsize
    est = (2 * bn * tk * eb          # x tile (double-buffered)
           + 2 * tk * f_pad * eb     # backbone weight slice
           + 2 * 1 * f_pad * 4       # bias
           + 2 * f_pad * c_pad * eb  # classifier weight^T (resident)
           + 2 * bn * c_pad * 4      # output tile
           + bn * f_pad * 4)         # f32 accumulator scratch
    vmem_limit = int(min(64 * 1024 * 1024, max(2 * est + 4 * 1024 * 1024,
                                               16 * 1024 * 1024)))

    out = pl.pallas_call(
        lucir_fused_kernel,
        out_shape=jax.ShapeDtypeStruct((n_pad, c_pad), jnp.float32),
        grid=grid,
        in_specs=[
            pl.BlockSpec((bn, tk), lambda i, k: (i, k)),       # x tile
            pl.BlockSpec((tk, f_pad), lambda i, k: (k, 0)),    # backbone weight K-slice
            pl.BlockSpec((1, f_pad), lambda i, k: (0, 0)),     # backbone bias
            pl.BlockSpec((f_pad, c_pad), lambda i, k: (0, 0)),  # classifier weight^T
        ],
        out_specs=pl.BlockSpec((bn, c_pad), lambda i, k: (i, 0)),
        scratch_shapes=[pltpu.VMEM((bn, f_pad), jnp.float32)],
        compiler_params=pltpu.CompilerParams(
            dimension_semantics=("parallel", "arbitrary"),
            vmem_limit_bytes=vmem_limit),
    )(x_p, prep["wb_p"], prep["bb_p"], prep["wct_p"])

    return out[:n, :num_class]


# -------------------------------- main --------------------------------------

if __name__ == "__main__":
    # Small shapes consistent with the module.
    N, C, H, W = 2, 4, 16, 16
    FEAT_DIM = 32
    NUM_CLASS = 10
    D_IN = C * H * W

    key = jax.random.PRNGKey(0)
    k_x, k_wb, k_bb, k_wc = jax.random.split(key, 4)

    x = jax.random.normal(k_x, (N, C, H, W), dtype=jnp.float32)

    # Deterministic backbone params (simple linear+relu backbone stand-in; the
    # real backbone is injected externally in the original code).
    bb_std = 1.0 / jnp.sqrt(jnp.float32(D_IN))
    w_b = jax.random.uniform(k_wb, (D_IN, FEAT_DIM), jnp.float32, -bb_std, bb_std)
    b_b = jax.random.uniform(k_bb, (1, FEAT_DIM), jnp.float32, -bb_std, bb_std)

    # CosineLinear params: weight uniform(-stdv, stdv), stdv = 1/sqrt(feat_dim);
    # sigma initialized to 1.0 (learnable scale).
    cl_std = 1.0 / jnp.sqrt(jnp.float32(FEAT_DIM))
    w_c = jax.random.uniform(k_wc, (NUM_CLASS, FEAT_DIM), jnp.float32,
                             -cl_std, cl_std)
    sigma = jnp.ones((1,), dtype=jnp.float32)

    # Reference in plain JAX (F.normalize semantics with eps=1e-12).
    x_flat = x.reshape(N, -1)
    feat_ref = jnp.maximum(x_flat @ w_b + b_b, 0.0)
    f_n = feat_ref / jnp.maximum(
        jnp.linalg.norm(feat_ref, axis=-1, keepdims=True), 1e-12)
    w_n = w_c / jnp.maximum(jnp.linalg.norm(w_c, axis=-1, keepdims=True), 1e-12)
    logits_ref = sigma[0] * (f_n @ w_n.T)

    # 1) Exact-semantics f32 path (tk_max=512 -> 2 K-steps, exercises the
    #    accumulator init/accumulate/finalize path).
    prep_f32 = prepare_lucir_params(w_b, b_b, w_c, sigma, mxu_dtype=jnp.float32)
    logits_f32 = lucir_forward(x, prep_f32, tk_max=512)
    jax.block_until_ready(logits_f32)
    assert logits_f32.shape == (N, NUM_CLASS)
    assert jnp.allclose(logits_f32, logits_ref, atol=1e-5, rtol=1e-5)

    # 2) Production bf16-MXU path (f32 accumulation + f32 norm math); bf16
    #    operand quantization -> looser tolerance vs. the f32 reference.
    prep_bf16 = prepare_lucir_params(w_b, b_b, w_c, sigma, mxu_dtype=jnp.bfloat16)
    logits_bf16 = lucir_forward(x, prep_bf16, tk_max=512)
    jax.block_until_ready(logits_bf16)
    assert logits_bf16.shape == (N, NUM_CLASS)
    assert jnp.allclose(logits_bf16, logits_ref, atol=2e-2, rtol=2e-2)

    print("KERNEL_OK")
</pallas_src>

<mosaic_0001>
module attributes {stable_mosaic.version = 11 : i64} {
  func.func @lucir_fused_kernel(%arg0: i32, %arg1: i32, %arg2: memref<8x512xf32, #tpu.memory_space<vmem>>, %arg3: memref<512x128xf32, #tpu.memory_space<vmem>>, %arg4: memref<1x128xf32, #tpu.memory_space<vmem>>, %arg5: memref<128x128xf32, #tpu.memory_space<vmem>>, %arg6: memref<8x128xf32, #tpu.memory_space<vmem>>, %arg7: memref<8x128xf32, #tpu.memory_space<vmem>>) attributes {dimension_semantics = [#tpu.dimension_semantics<parallel>, #tpu.dimension_semantics<arbitrary>], iteration_bounds = array<i64: 1, 2>, scalar_prefetch = 0 : i64, scratch_operands = 1 : i64, tpu.core_type = #tpu.core_type<tc>, window_params = [{transform_indices = @transform_0, window_bounds = array<i64: 8, 512>}, {transform_indices = @transform_1, window_bounds = array<i64: 512, 128>}, {pipeline_mode = #tpu.pipeline_mode<synchronous>, transform_indices = @transform_2, window_bounds = array<i64: 1, 128>}, {pipeline_mode = #tpu.pipeline_mode<synchronous>, transform_indices = @transform_3, window_bounds = array<i64: 128, 128>}, {transform_indices = @transform_4, window_bounds = array<i64: 8, 128>}]} {
    %c0_i32 = arith.constant 0 : i32
    %0 = arith.cmpi eq, %arg1, %c0_i32 : i32
    %1 = arith.extui %0 : i1 to i32
    %c0_i32_0 = arith.constant 0 : i32
    %2 = arith.cmpi ne, %1, %c0_i32_0 : i32
    scf.if %2 {
      %cst_9 = arith.constant 0.000000e+00 : f32
      %12 = vector.broadcast %cst_9 : f32 to vector<8x128xf32>
      %c0_10 = arith.constant 0 : index
      %c0_11 = arith.constant 0 : index
      %13 = vector.load %arg7[%c0_10, %c0_11] : memref<8x128xf32, #tpu.memory_space<vmem>>, vector<8x128xf32>
      tpu.vector_store %arg7[%c0_10, %c0_11], %12 {strides = array<i32>} : memref<8x128xf32, #tpu.memory_space<vmem>>, vector<8x128xf32>,
    } else {
    }
    %c0 = arith.constant 0 : index
    %c0_1 = arith.constant 0 : index
    %3 = vector.load %arg7[%c0, %c0_1] : memref<8x128xf32, #tpu.memory_space<vmem>>, vector<8x128xf32>
    %c0_2 = arith.constant 0 : index
    %c0_3 = arith.constant 0 : index
    %4 = vector.load %arg2[%c0_2, %c0_3] : memref<8x512xf32, #tpu.memory_space<vmem>>, vector<8x512xf32>
    %c0_4 = arith.constant 0 : index
    %c0_5 = arith.constant 0 : index
    %5 = vector.load %arg3[%c0_4, %c0_5] : memref<512x128xf32, #tpu.memory_space<vmem>>, vector<512x128xf32>
    %cst = arith.constant dense<0.000000e+00> : vector<8x128xf32>
    %6 = tpu.matmul %4, %5, %cst {dimension_numbers = #tpu.dot_dimension_numbers<[1], [0], [0], [1], [0, 0, 1, 1], [], []>} : vector<8x512xf32>, vector<512x128xf32>, vector<8x128xf32> -> vector<8x128xf32>
    %7 = arith.addf %3, %6 : vector<8x128xf32>
    %c0_6 = arith.constant 0 : index
    %c0_7 = arith.constant 0 : index
    %8 = vector.load %arg7[%c0_6, %c0_7] : memref<8x128xf32, #tpu.memory_space<vmem>>, vector<8x128xf32>
    tpu.vector_store %arg7[%c0_6, %c0_7], %7 {strides = array<i32>} : memref<8x128xf32, #tpu.memory_space<vmem>>, vector<8x128xf32>,
    %c1_i32 = arith.constant 1 : i32
    %9 = arith.cmpi eq, %arg1, %c1_i32 : i32
    %10 = arith.extui %9 : i1 to i32
    %c0_i32_8 = arith.constant 0 : i32
    %11 = arith.cmpi ne, %10, %c0_i32_8 : i32
    scf.if %11 {
      %c0_9 = arith.constant 0 : index
      %c0_10 = arith.constant 0 : index
      %12 = vector.load %arg7[%c0_9, %c0_10] : memref<8x128xf32, #tpu.memory_space<vmem>>, vector<8x128xf32>
      %c0_11 = arith.constant 0 : index
      %c0_12 = arith.constant 0 : index
      %13 = vector.load %arg4[%c0_11, %c0_12] : memref<1x128xf32, #tpu.memory_space<vmem>>, vector<1x128xf32>
      %14 = vector.broadcast %13 : vector<1x128xf32> to vector<8x128xf32>
      %15 = arith.addf %12, %14 : vector<8x128xf32>
      %cst_13 = arith.constant 0.000000e+00 : f32
      %16 = vector.broadcast %cst_13 : f32 to vector<8x128xf32>
      %17 = arith.maximumf %15, %16 : vector<8x128xf32>
      %c0_14 = arith.constant 0 : index
      %c0_15 = arith.constant 0 : index
      %18 = vector.load %arg5[%c0_14, %c0_15] : memref<128x128xf32, #tpu.memory_space<vmem>>, vector<128x128xf32>
      %cst_16 = arith.constant dense<0.000000e+00> : vector<8x128xf32>
      %19 = tpu.matmul %17, %18, %cst_16 {dimension_numbers = #tpu.dot_dimension_numbers<[1], [0], [0], [1], [0, 0, 1, 1], [], []>} : vector<8x128xf32>, vector<128x128xf32>, vector<8x128xf32> -> vector<8x128xf32>
      %20 = arith.mulf %17, %17 : vector<8x128xf32>
      %cst_17 = arith.constant dense<0.000000e+00> : vector<8xf32>
      %21 = vector.multi_reduction <add>, %20, %cst_17 [1] : vector<8x128xf32> to vector<8xf32>
      %22 = vector.shape_cast %21 : vector<8xf32> to vector<8x1xf32>
      %cst_18 = arith.constant 1.000000e-24 : f32
      %23 = vector.broadcast %cst_18 : f32 to vector<8x1xf32>
      %24 = arith.maximumf %22, %23 : vector<8x1xf32>
      %25 = math.rsqrt %24 : vector<8x1xf32>
      %26 = vector.broadcast %25 : vector<8x1xf32> to vector<8x128xf32>
      %27 = arith.mulf %19, %26 : vector<8x128xf32>
      %c0_19 = arith.constant 0 : index
      %c0_20 = arith.constant 0 : index
      %28 = vector.load %arg6[%c0_19, %c0_20] : memref<8x128xf32, #tpu.memory_space<vmem>>, vector<8x128xf32>
      tpu.vector_store %arg6[%c0_19, %c0_20], %27 {strides = array<i32>} : memref<8x128xf32, #tpu.memory_space<vmem>>, vector<8x128xf32>,
    } else {
    }
    return
  }
  func.func @transform_0(%arg0: i32, %arg1: i32) -> (i32, i32) {
    %c0_i32 = arith.constant 0 : i32
    return %arg0, %arg1 : i32, i32
  }
  func.func @transform_1(%arg0: i32, %arg1: i32) -> (i32, i32) {
    %c0_i32 = arith.constant 0 : i32
    %c0_i32_0 = arith.constant 0 : i32
    return %arg1, %c0_i32 : i32, i32
  }
  func.func @transform_2(%arg0: i32, %arg1: i32) -> (i32, i32) {
    %c0_i32 = arith.constant 0 : i32
    %c0_i32_0 = arith.constant 0 : i32
    %c0_i32_1 = arith.constant 0 : i32
    return %c0_i32, %c0_i32_0 : i32, i32
  }
  func.func @transform_3(%arg0: i32, %arg1: i32) -> (i32, i32) {
    %c0_i32 = arith.constant 0 : i32
    %c0_i32_0 = arith.constant 0 : i32
    %c0_i32_1 = arith.constant 0 : i32
    return %c0_i32, %c0_i32_0 : i32, i32
  }
  func.func @transform_4(%arg0: i32, %arg1: i32) -> (i32, i32) {
    %c0_i32 = arith.constant 0 : i32
    %c0_i32_0 = arith.constant 0 : i32
    return %arg0, %c0_i32 : i32, i32
  }
}

</mosaic_0001>

<llo_original>
// kernel: tpu_custom_call.1
$region0: #{tpu_custom_call.1}
  #allocation0 [shape = 'u32[]', space=smem, size = 0x4, offset = 0x4, fixed_abs, tag = 'smem constant byte address 0x4 - core index']
  #allocation1 [shape = 'u32[72,128]{1,0:T(1,128)}', space=vmem, size = 0x9000, scoped, tag = 'internal scratch']
  #allocation2 [shape = 'f32[8,128]{1,0:T(8,128)}', space=vmem, size = 0x1000, scoped, tag = 'scratch operand']
  %s0 = inlined_call_operand.hbm [shape: f32[8,1024], index: 0, kind: input, shape index: {}]
  %s1 = inlined_call_operand.hbm [shape: f32[1024,128], index: 1, kind: input, shape index: {}]
  %s2 = inlined_call_operand.vmem [shape: f32[1,128], index: 2, kind: input, shape index: {}]
  %s3 = inlined_call_operand.hbm [shape: f32[128,128], index: 3, kind: input, shape index: {}]
  %s4 = inlined_call_operand.hbm [shape: f32[8,128], index: 4, kind: output, shape index: {}]
  %s5 = sld [smem:[#allocation0]]
  $region69: #{tpu_custom_call.1} parent=0
    _
  %s7 = ssub.s32 1, %s5
  %s8 = scalar_select 0, %s7, %s5
  $region1: #{tpu_custom_call.1} parent=0
    #allocation3 [shape = 'u8[32768]{0}', space=vmem, size = 0x8000, scoped, tag = 'input window, operand 0']
    #allocation4 [shape = 's32[2]{0}', space=sflag, size = 0x8, scoped, tag = 'scoped memory for tpu_custom_call.1']
    #allocation5 [shape = 's32[2]{0}', space=sflag, size = 0x8, scoped, tag = 'scoped memory for tpu_custom_call.1']
    #allocation6 [shape = 'u8[524288]{0}', space=vmem, size = 0x80000, scoped, tag = 'input window, operand 1']
    #allocation7 [shape = 's32[2]{0}', space=sflag, size = 0x8, scoped, tag = 'scoped memory for tpu_custom_call.1']
    #allocation8 [shape = 'u8[65536]{0}', space=vmem, size = 0x10000, scoped, tag = 'input window, operand 3, single buffered']
    #allocation9 [shape = 'u8[4096]{0}', space=vmem, size = 0x1000, scoped, tag = 'output window, operand 0, single buffered']
    %9 = vsyncpa [#allocation4], 0
    %s10 = scalar_lea.sflag [#allocation4], 1
    %11 = vsyncpa %s10, 0
    %12 = vsyncpa [#allocation7], 0
    %s13 = scalar_lea.sflag [#allocation7], 1
    %14 = vsyncpa %s13, 0
    %15 = vsyncpa [#allocation5], 0
    loop: start=0, step=1, limit=4
    $region2: #{tpu_custom_call.1} parent=1 // loop_pre_header
      _
    $region3: #{tpu_custom_call.1} parent=1 // loop_header
      %s17 = sphi 0, %s21
      %p18 = scmp.ge.s32.totalorder %s17, 4
      %s24 = sphi 0, %s36
      %s25 = sphi 0, %s32
      %s26 = sphi 0, %s24
      %s27 = sphi 0, %s25
      %s28 = sphi 0, %s26
      %s29 = sphi 0, %s27
      %s41 = sphi 0, %s43
      %s44 = sphi 0, %s41
      %s45 = sphi 0, %s44
      %s61 = sphi 0, %s45
      %s67 = sphi 0, %s69
      %s70 = sphi 0, %s67
      %s71 = sphi 0, %s70
      %s87 = sphi 0, %s71
      %s91 = sphi 0, %s91
      %s93 = sphi 0, %s91
      %s94 = sphi 0, %s93
      %s108 = sphi 0, %s94
      %s112 = sphi 0, %s112
      %s114 = sphi 0, %s112
      %s115 = sphi 0, %s114
      %s129 = sphi 0, %s115
      %s135 = sphi 0, %s137
      %s138 = sphi 0, %s135
      %s139 = sphi 0, %s138
      %s155 = sphi 0, %s139
    $region4: #{tpu_custom_call.1} parent=1 // loop_header_branch
      %20 = sbr.rel (%p18) target = $region8
    $region5: #{tpu_custom_call.1} parent=1 // loop_body
      %s22 = ssub.s32 %s17, 1
      %s23 = ssub.s32 %s17, 2
      %s30 = sadd.s32 1, %s25
      %p31 = scmp.ge.s32.totalorder %s30, 2
      %s32 = scalar_select %p31, 0, %s30
      %s33 = sadd.s32 1, %s24
      %s34 = scalar_select %p31, %s33, %s24
      %p35 = scmp.ge.s32.totalorder %s34, 1
      %s36 = scalar_select %p35, 0, %s34
      %s37 = ssub.s32 %s24, %s36
      %s38 = ssub.s32 %s25, %s32
      %s39 = sor.u32 %s37, %s38
      %p40 = scmp.eq.s32.totalorder %s39, 0
      %s42 = sadd.s32 %s41, 1
      %s43 = scalar_select %p40, %s41, %s42
      %p46 = pneg %p40
      %p47 = scmp.eq.s32.totalorder %s17, 1
      %p48 = por %p46, %p47
      %p49 = scmp.ne.s32.totalorder %s41, %s44
      %p50 = scmp.eq.s32.totalorder %s17, 0
      %p51 = por %p49, %p50
      %p52 = scmp.ne.s32.totalorder %s41, %s44
      %p53 = scmp.eq.s32.totalorder %s22, 1
      %p54 = por %p52, %p53
      %p55 = scmp.ne.s32.totalorder %s44, %s45
      %p56 = scmp.eq.s32.totalorder %s22, 0
      %p57 = por %p55, %p56
      %p58 = scmp.ne.s32.totalorder %s44, %s45
      %p59 = scmp.eq.s32.totalorder %s23, 1
      %p60 = por %p58, %p59
      %p62 = scmp.ne.s32.totalorder %s45, %s61
      %p63 = scmp.eq.s32.totalorder %s23, 0
      %p64 = por %p62, %p63
      %s65 = ssub.s32 %s25, %s32
      %p66 = scmp.eq.s32.totalorder %s65, 0
      %s68 = sadd.s32 %s67, 1
      %s69 = scalar_select %p66, %s67, %s68
      %p72 = pneg %p66
      %p73 = scmp.eq.s32.totalorder %s17, 1
      %p74 = por %p72, %p73
      %p75 = scmp.ne.s32.totalorder %s67, %s70
      %p76 = scmp.eq.s32.totalorder %s17, 0
      %p77 = por %p75, %p76
      %p78 = scmp.ne.s32.totalorder %s67, %s70
      %p79 = scmp.eq.s32.totalorder %s22, 1
      %p80 = por %p78, %p79
      %p81 = scmp.ne.s32.totalorder %s70, %s71
      %p82 = scmp.eq.s32.totalorder %s22, 0
      %p83 = por %p81, %p82
      %p84 = scmp.ne.s32.totalorder %s70, %s71
      %p85 = scmp.eq.s32.totalorder %s23, 1
      %p86 = por %p84, %p85
      %p88 = scmp.ne.s32.totalorder %s71, %s87
      %p89 = scmp.eq.s32.totalorder %s23, 0
      %p90 = por %p88, %p89
      %s92 = sadd.s32 %s91, 1
      %p95 = scmp.eq.s32.totalorder %s17, 1
      %p96 = scmp.ne.s32.totalorder %s91, %s93
      %p97 = scmp.eq.s32.totalorder %s17, 0
      %p98 = por %p96, %p97
      %p99 = scmp.ne.s32.totalorder %s91, %s93
      %p100 = scmp.eq.s32.totalorder %s22, 1
      %p101 = por %p99, %p100
      %p102 = scmp.ne.s32.totalorder %s93, %s94
      %p103 = scmp.eq.s32.totalorder %s22, 0
      %p104 = por %p102, %p103
      %p105 = scmp.ne.s32.totalorder %s93, %s94
      %p106 = scmp.eq.s32.totalorder %s23, 1
      %p107 = por %p105, %p106
      %p109 = scmp.ne.s32.totalorder %s94, %s108
      %p110 = scmp.eq.s32.totalorder %s23, 0
      %p111 = por %p109, %p110
      %s113 = sadd.s32 %s112, 1
      %p116 = scmp.eq.s32.totalorder %s17, 1
      %p117 = scmp.ne.s32.totalorder %s112, %s114
      %p118 = scmp.eq.s32.totalorder %s17, 0
      %p119 = por %p117, %p118
      %p120 = scmp.ne.s32.totalorder %s112, %s114
      %p121 = scmp.eq.s32.totalorder %s22, 1
      %p122 = por %p120, %p121
      %p123 = scmp.ne.s32.totalorder %s114, %s115
      %p124 = scmp.eq.s32.totalorder %s22, 0
      %p125 = por %p123, %p124
      %p126 = scmp.ne.s32.totalorder %s114, %s115
      %p127 = scmp.eq.s32.totalorder %s23, 1
      %p128 = por %p126, %p127
      %p130 = scmp.ne.s32.totalorder %s115, %s129
      %p131 = scmp.eq.s32.totalorder %s23, 0
      %p132 = por %p130, %p131
      %s133 = ssub.s32 %s24, %s36
      %p134 = scmp.eq.s32.totalorder %s133, 0
      %s136 = sadd.s32 %s135, 1
      %s137 = scalar_select %p134, %s135, %s136
      %p140 = pneg %p134
      %p141 = scmp.eq.s32.totalorder %s17, 1
      %p142 = por %p140, %p141
      %p143 = scmp.ne.s32.totalorder %s135, %s138
      %p144 = scmp.eq.s32.totalorder %s17, 0
      %p145 = por %p143, %p144
      %p146 = scmp.ne.s32.totalorder %s135, %s138
      %p147 = scmp.eq.s32.totalorder %s22, 1
      %p148 = por %p146, %p147
      %p149 = scmp.ne.s32.totalorder %s138, %s139
      %p150 = scmp.eq.s32.totalorder %s22, 0
      %p151 = por %p149, %p150
      %p152 = scmp.ne.s32.totalorder %s138, %s139
      %p153 = scmp.eq.s32.totalorder %s23, 1
      %p154 = por %p152, %p153
      %p156 = scmp.ne.s32.totalorder %s139, %s155
      %p157 = scmp.eq.s32.totalorder %s23, 0
      %p158 = por %p156, %p157
      %p159 = scmp.le.s32.totalorder 1, %s17
      %p160 = scmp.lt.s32.totalorder %s17, 3
      %p161 = pnand %p159, %p160
      %p162 = pneg %p161
      // Predicated region
      $region9: #{tpu_custom_call.1} parent=5 // pred_check
        _
      $region10: #{tpu_custom_call.1} parent=5 // pred_check_branch
        %164 = sbr.rel (%p161) target = $region12
      $region11: #{tpu_custom_call.1} parent=5 // pred_region
        %s165 = ssub.s32 %s17, 1
        // Predicated region
        $region13: #{tpu_custom_call.1} parent=11 // pred_check
          %p166 = pneg %p104
        $region14: #{tpu_custom_call.1} parent=11 // pred_check_branch
          %168 = sbr.rel (%p166) target = $region16
        $region15: #{tpu_custom_call.1} parent=11 // pred_region
          _
        $region16: #{tpu_custom_call.1} parent=11 // pred_fallthru
          _
        // Predicated region
        $region17: #{tpu_custom_call.1} parent=11 // pred_check
          %p169 = pneg %p125
        $region18: #{tpu_custom_call.1} parent=11 // pred_check_branch
          %171 = sbr.rel (%p169) target = $region20
        $region19: #{tpu_custom_call.1} parent=11 // pred_region
          %173 = vsyncadd [#allocation7], 0
          %s174 = sshll.u32 %s3, 4
          %s175 = int_to_ptr.hbm [resolvable:$true] %s174
          %s176 = sshll.u32 [#allocation8], 4
          %s177 = int_to_ptr.vmem [resolvable:$true] %s176
          %182 = dma.hbm_to_vmem [thread:$0]  %s175, 2048, %s177, [#allocation7], 128, 128, 8
        $region20: #{tpu_custom_call.1} parent=11 // pred_fallthru
          _
      $region12: #{tpu_custom_call.1} parent=5 // pred_fallthru
        _
      %p183 = scmp.lt.s32.totalorder %s17, 2
      // Predicated region
      $region21: #{tpu_custom_call.1} parent=5 // pred_check
        %p184 = pneg %p183
      $region22: #{tpu_custom_call.1} parent=5 // pred_check_branch
        %186 = sbr.rel (%p184) target = $region24
      $region23: #{tpu_custom_call.1} parent=5 // pred_region
        // Predicated region
        $region25: #{tpu_custom_call.1} parent=23 // pred_check
          %p187 = pneg %p51
        $region26: #{tpu_custom_call.1} parent=23 // pred_check_branch
          %189 = sbr.rel (%p187) target = $region28
        $region27: #{tpu_custom_call.1} parent=23 // pred_region
          %s190 = sand.u32 %s41, 1
          %s191 = scalar_lea.sflag [#allocation4], %s190
          %s192 = sand.u32 %s41, 1
          %s193 = smul.addr %s192, 32
          %s194 = scalar_lea.vmem [#allocation3], %s193
          %s195 = smul.u32 4, %s25
          %197 = vsyncadd %s191, 0
          %s198 = smul.addr %s24, 8
          %s199 = sadd.s32 %s195, %s198
          %s200 = smul.addr %s199, 8
          %s201 = scalar_lea.hbm %s0, %s200
          %s203 = sshll.u32 %s201, 4
          %s204 = int_to_ptr.hbm [resolvable:$true] %s203
          %s205 = sshll.u32 %s194, 4
          %s206 = int_to_ptr.vmem [resolvable:$true] %s205
          %208 = dma.hbm_to_vmem [thread:$0]  %s204, 512, %s206, %s191
        $region28: #{tpu_custom_call.1} parent=23 // pred_fallthru
          _
        // Predicated region
        $region29: #{tpu_custom_call.1} parent=23 // pred_check
          %p209 = pneg %p77
        $region30: #{tpu_custom_call.1} parent=23 // pred_check_branch
          %211 = sbr.rel (%p209) target = $region32
        $region31: #{tpu_custom_call.1} parent=23 // pred_region
          %s212 = sand.u32 %s17, 1
          %s213 = scalar_lea.sflag [#allocation7], %s212
          %s214 = sand.u32 %s67, 1
          %s215 = smul.addr %s214, 512
          %s216 = scalar_lea.vmem [#allocation6], %s215
          %s217 = smul.u32 64, %s25
          %219 = vsyncadd %s213, 0
          %s220 = smul.addr %s217, 8
          %s221 = scalar_lea.hbm %s1, %s220
          %s222 = sshll.u32 %s221, 4
          %s223 = int_to_ptr.hbm [resolvable:$true] %s222
          %s224 = sshll.u32 %s216, 4
          %s225 = int_to_ptr.vmem [resolvable:$true] %s224
          %230 = dma.hbm_to_vmem [thread:$0]  %s223, 8192, %s225, %s213, 128, 128, 8
        $region32: #{tpu_custom_call.1} parent=23 // pred_fallthru
          _
      $region24: #{tpu_custom_call.1} parent=5 // pred_fallthru
        _
      %p231 = scmp.le.s32.totalorder 1, %s17
      %p232 = scmp.lt.s32.totalorder %s17, 3
      %p233 = pnand %p231, %p232
      %p234 = pneg %p233
      // Predicated region
      $region33: #{tpu_custom_call.1} parent=5 // pred_check
        _
      $region34: #{tpu_custom_call.1} parent=5 // pred_check_branch
        %236 = sbr.rel (%p233) target = $region36
      $region35: #{tpu_custom_call.1} parent=5 // pred_region
        %s237 = ssub.s32 %s17, 1
        %s238 = sand.u32 %s44, 1
        %s239 = scalar_lea.sflag [#allocation4], %s238
        %s240 = sand.u32 %s44, 1
        %s241 = smul.addr %s240, 32
        %s242 = scalar_lea.vmem [#allocation3], %s241
        // Predicated region
        $region37: #{tpu_custom_call.1} parent=35 // pred_check
          %p243 = pneg %p57
        $region38: #{tpu_custom_call.1} parent=35 // pred_check_branch
          %245 = sbr.rel (%p243) target = $region40
        $region39: #{tpu_custom_call.1} parent=35 // pred_region
          %247 = dma.done %s239, 512
        $region40: #{tpu_custom_call.1} parent=35 // pred_fallthru
          _
        %s248 = sand.u32 %s22, 1
        %s249 = scalar_lea.sflag [#allocation7], %s248
        %s250 = sand.u32 %s70, 1
        %s251 = smul.addr %s250, 512
        %s252 = scalar_lea.vmem [#allocation6], %s251
        // Predicated region
        $region41: #{tpu_custom_call.1} parent=35 // pred_check
          %p253 = pneg %p83
        $region42: #{tpu_custom_call.1} parent=35 // pred_check_branch
          %255 = sbr.rel (%p253) target = $region44
        $region43: #{tpu_custom_call.1} parent=35 // pred_region
          %257 = dma.done %s249, 8192
        $region44: #{tpu_custom_call.1} parent=35 // pred_fallthru
          _
        // Predicated region
        $region45: #{tpu_custom_call.1} parent=35 // pred_check
          %p258 = pneg %p125
        $region46: #{tpu_custom_call.1} parent=35 // pred_check_branch
          %260 = sbr.rel (%p258) target = $region48
        $region47: #{tpu_custom_call.1} parent=35 // pred_region
          %262 = dma.done [#allocation7], 2048
        $region48: #{tpu_custom_call.1} parent=35 // pred_fallthru
          _
        %s263 = sand.u32 %s44, 1
        %s264 = scalar_lea.sflag [#allocation4], %s263
        %s265 = sand.u32 %s44, 1
        %s266 = smul.addr %s265, 32
        %s267 = scalar_lea.vmem [#allocation3], %s266
        %p268 = pneg %p57
        %p269 = pneg %p54
        %s270 = sand.u32 %s22, 1
        %s271 = scalar_lea.sflag [#allocation7], %s270
        %s272 = sand.u32 %s70, 1
        %s273 = smul.addr %s272, 512
        %s274 = scalar_lea.vmem [#allocation6], %s273
        %p275 = pneg %p83
        %p276 = pneg %p80
        %p277 = pneg %p104
        %p278 = pneg %p101
        %p279 = pneg %p125
        %p280 = pneg %p122
        %p281 = pneg %p151
        %p282 = pneg %p148
        %s283 = smul.u32 4, %s27
        %s284 = smul.u32 64, %s27
        %p285 = scmp.eq.s32.totalorder %s27, 0
        // Predicated region
        $region49: #{tpu_custom_call.1} parent=35 // pred_check
          %p286 = pneg %p285
        $region50: #{tpu_custom_call.1} parent=35 // pred_check_branch
          %288 = sbr.rel (%p286) target = $region52
        $region51: #{tpu_custom_call.1} parent=35 // pred_region
          %289 = vst [vmem:[#allocation2] sm:$0xff] 0.0
        $region52: #{tpu_custom_call.1} parent=35 // pred_fallthru
          _
        %v290 = vld [vmem:[#allocation2] sm:$0xff]
        %v291 = vld [vmem:[%s242] sm:$0xff]
        %v292 = vld [vmem:[%s242 + $0x8] sm:$0xff]
        %v293 = vld [vmem:[%s242 + $0x10] sm:$0xff]
        %v294 = vld [vmem:[%s242 + $0x18] sm:$0xff]
        %v295 = vld [vmem:[%s252] sm:$0xff]
        %v296 = vld [vmem:[%s252 + $0x8] sm:$0xff]
        %v297 = vld [vmem:[%s252 + $0x10] sm:$0xff]
        %v298 = vld [vmem:[%s252 + $0x18] sm:$0xff]
        %v299 = vld [vmem:[%s252 + $0x20] sm:$0xff]
        %v300 = vld [vmem:[%s252 + $0x28] sm:$0xff]
        %v301 = vld [vmem:[%s252 + $0x30] sm:$0xff]
        %v302 = vld [vmem:[%s252 + $0x38] sm:$0xff]
        %v303 = vld [vmem:[%s252 + $0x40] sm:$0xff]
        %v304 = vld [vmem:[%s252 + $0x48] sm:$0xff]
        %v305 = vld [vmem:[%s252 + $0x50] sm:$0xff]
        %v306 = vld [vmem:[%s252 + $0x58] sm:$0xff]
        %v307 = vld [vmem:[%s252 + $0x60] sm:$0xff]
        %v308 = vld [vmem:[%s252 + $0x68] sm:$0xff]
        %v309 = vld [vmem:[%s252 + $0x70] sm:$0xff]
        %v310 = vld [vmem:[%s252 + $0x78] sm:$0xff]
        %v311 = vld [vmem:[%s252 + $0x80] sm:$0xff]
        %v312 = vld [vmem:[%s252 + $0x88] sm:$0xff]
        %v313 = vld [vmem:[%s252 + $0x90] sm:$0xff]
        %v314 = vld [vmem:[%s252 + $0x98] sm:$0xff]
        %v315 = vld [vmem:[%s252 + $0xa0] sm:$0xff]
        %v316 = vld [vmem:[%s252 + $0xa8] sm:$0xff]
        %v317 = vld [vmem:[%s252 + $0xb0] sm:$0xff]
        %v318 = vld [vmem:[%s252 + $0xb8] sm:$0xff]
        %v319 = vld [vmem:[%s252 + $0xc0] sm:$0xff]
        %v320 = vld [vmem:[%s252 + $0xc8] sm:$0xff]
        %v321 = vld [vmem:[%s252 + $0xd0] sm:$0xff]
        %v322 = vld [vmem:[%s252 + $0xd8] sm:$0xff]
        %v323 = vld [vmem:[%s252 + $0xe0] sm:$0xff]
        %v324 = vld [vmem:[%s252 + $0xe8] sm:$0xff]
        %v325 = vld [vmem:[%s252 + $0xf0] sm:$0xff]
        %v326 = vld [vmem:[%s252 + $0xf8] sm:$0xff]
        %v327 = vld [vmem:[%s252 + $0x100] sm:$0xff]
        %v328 = vld [vmem:[%s252 + $0x108] sm:$0xff]
        %v329 = vld [vmem:[%s252 + $0x110] sm:$0xff]
        %v330 = vld [vmem:[%s252 + $0x118] sm:$0xff]
        %v331 = vld [vmem:[%s252 + $0x120] sm:$0xff]
        %v332 = vld [vmem:[%s252 + $0x128] sm:$0xff]
        %v333 = vld [vmem:[%s252 + $0x130] sm:$0xff]
        %v334 = vld [vmem:[%s252 + $0x138] sm:$0xff]
        %v335 = vld [vmem:[%s252 + $0x140] sm:$0xff]
        %v336 = vld [vmem:[%s252 + $0x148] sm:$0xff]
        %v337 = vld [vmem:[%s252 + $0x150] sm:$0xff]
        %v338 = vld [vmem:[%s252 + $0x158] sm:$0xff]
        %v339 = vld [vmem:[%s252 + $0x160] sm:$0xff]
        %v340 = vld [vmem:[%s252 + $0x168] sm:$0xff]
        %v341 = vld [vmem:[%s252 + $0x170] sm:$0xff]
        %v342 = vld [vmem:[%s252 + $0x178] sm:$0xff]
        %v343 = vld [vmem:[%s252 + $0x180] sm:$0xff]
        %v344 = vld [vmem:[%s252 + $0x188] sm:$0xff]
        %v345 = vld [vmem:[%s252 + $0x190] sm:$0xff]
        %v346 = vld [vmem:[%s252 + $0x198] sm:$0xff]
        %v347 = vld [vmem:[%s252 + $0x1a0] sm:$0xff]
        %v348 = vld [vmem:[%s252 + $0x1a8] sm:$0xff]
        %v349 = vld [vmem:[%s252 + $0x1b0] sm:$0xff]
        %v350 = vld [vmem:[%s252 + $0x1b8] sm:$0xff]
        %v351 = vld [vmem:[%s252 + $0x1c0] sm:$0xff]
        %v352 = vld [vmem:[%s252 + $0x1c8] sm:$0xff]
        %v353 = vld [vmem:[%s252 + $0x1d0] sm:$0xff]
        %v354 = vld [vmem:[%s252 + $0x1d8] sm:$0xff]
        %v355 = vld [vmem:[%s252 + $0x1e0] sm:$0xff]
        %v356 = vld [vmem:[%s252 + $0x1e8] sm:$0xff]
        %v357 = vld [vmem:[%s252 + $0x1f0] sm:$0xff]
        %v358 = vld [vmem:[%s252 + $0x1f8] sm:$0xff]
        %359 = vmatpush.msra.mxu0 %v310
        %360 = vmatpush.msra.mxu0 %v309
        %361 = vmatpush.msra.mxu0 %v308
        %362 = vmatpush.msra.mxu0 %v307
        %363 = vmatpush.msra.mxu0 %v306
        %364 = vmatpush.msra.mxu0 %v305
        %365 = vmatpush.msra.mxu0 %v304
        %366 = vmatpush.msra.mxu0 %v303
        %367 = vmatpush.msra.mxu0 %v302
        %368 = vmatpush.msra.mxu0 %v301
        %369 = vmatpush.msra.mxu0 %v300
        %370 = vmatpush.msra.mxu0 %v299
        %371 = vmatpush.msra.mxu0 %v298
        %372 = vmatpush.msra.mxu0 %v297
        %373 = vmatpush.msra.mxu0 %v296
        %374 = vmatpush.msra.mxu0 %v295
        %375 = vmatmul.f32.gmra.mxu0 %v291
        %v376 = vpop.f32.mrf.mxu0
        %v377 = vadd.f32 0.0, %v376
        %378 = vdwg.mxu0
        %379 = vmatpush.msra.mxu0 %v326
        %380 = vmatpush.msra.mxu0 %v325
        %381 = vmatpush.msra.mxu0 %v324
        %382 = vmatpush.msra.mxu0 %v323
        %383 = vmatpush.msra.mxu0 %v322
        %384 = vmatpush.msra.mxu0 %v321
        %385 = vmatpush.msra.mxu0 %v320
        %386 = vmatpush.msra.mxu0 %v319
        %387 = vmatpush.msra.mxu0 %v318
        %388 = vmatpush.msra.mxu0 %v317
        %389 = vmatpush.msra.mxu0 %v316
        %390 = vmatpush.msra.mxu0 %v315
        %391 = vmatpush.msra.mxu0 %v314
        %392 = vmatpush.msra.mxu0 %v313
        %393 = vmatpush.msra.mxu0 %v312
        %394 = vmatpush.msra.mxu0 %v311
        %395 = vmatmul.f32.gmra.mxu0 %v292
        %v396 = vpop.f32.mrf.mxu0
        %v397 = vadd.f32 %v377, %v396
        %398 = vdwg.mxu0
        %399 = vmatpush.msra.mxu0 %v342
        %400 = vmatpush.msra.mxu0 %v341
        %401 = vmatpush.msra.mxu0 %v340
        %402 = vmatpush.msra.mxu0 %v339
        %403 = vmatpush.msra.mxu0 %v338
        %404 = vmatpush.msra.mxu0 %v337
        %405 = vmatpush.msra.mxu0 %v336
        %406 = vmatpush.msra.mxu0 %v335
        %407 = vmatpush.msra.mxu0 %v334
        %408 = vmatpush.msra.mxu0 %v333
        %409 = vmatpush.msra.mxu0 %v332
        %410 = vmatpush.msra.mxu0 %v331
        %411 = vmatpush.msra.mxu0 %v330
        %412 = vmatpush.msra.mxu0 %v329
        %413 = vmatpush.msra.mxu0 %v328
        %414 = vmatpush.msra.mxu0 %v327
        %415 = vmatmul.f32.gmra.mxu0 %v293
        %v416 = vpop.f32.mrf.mxu0
        %v417 = vadd.f32 %v397, %v416
        %418 = vdwg.mxu0
        %419 = vmatpush.msra.mxu0 %v358
        %420 = vmatpush.msra.mxu0 %v357
        %421 = vmatpush.msra.mxu0 %v356
        %422 = vmatpush.msra.mxu0 %v355
        %423 = vmatpush.msra.mxu0 %v354
        %424 = vmatpush.msra.mxu0 %v353
        %425 = vmatpush.msra.mxu0 %v352
        %426 = vmatpush.msra.mxu0 %v351
        %427 = vmatpush.msra.mxu0 %v350
        %428 = vmatpush.msra.mxu0 %v349
        %429 = vmatpush.msra.mxu0 %v348
        %430 = vmatpush.msra.mxu0 %v347
        %431 = vmatpush.msra.mxu0 %v346
        %432 = vmatpush.msra.mxu0 %v345
        %433 = vmatpush.msra.mxu0 %v344
        %434 = vmatpush.msra.mxu0 %v343
        %435 = vmatmul.f32.gmra.mxu0 %v294
        %v436 = vpop.f32.mrf.mxu0
        %v437 = vadd.f32 %v417, %v436
        %438 = vdwg.mxu0
        %v439 = vadd.f32 %v290, %v437
        %440 = vst [vmem:[#allocation2] sm:$0xff] %v439
        %p441 = scmp.eq.s32.totalorder %s27, 1
        // Predicated region
        $region53: #{tpu_custom_call.1} parent=35 // pred_check
          %p442 = pneg %p441
        $region54: #{tpu_custom_call.1} parent=35 // pred_check_branch
          %444 = sbr.rel (%p442) target = $region56
        $region55: #{tpu_custom_call.1} parent=35 // pred_region
          %v445 = vld [vmem:[#allocation2] sm:$0xff]
          %v446 = vld [vmem:[%s2] sm:$0x1]
          %v448 = vperm.slane %v446, 0
          %v450 = vadd.f32 %v445, %v448
          %v451 = vmax.f32 %v450, 0.0
          %v452 = vld [vmem:[#allocation8] sm:$0xff]
          %v453 = vld [vmem:[#allocation8 + $0x8] sm:$0xff]
          %v454 = vld [vmem:[#allocation8 + $0x10] sm:$0xff]
          %v455 = vld [vmem:[#allocation8 + $0x18] sm:$0xff]
          %v456 = vld [vmem:[#allocation8 + $0x20] sm:$0xff]
          %v457 = vld [vmem:[#allocation8 + $0x28] sm:$0xff]
          %v458 = vld [vmem:[#allocation8 + $0x30] sm:$0xff]
          %v459 = vld [vmem:[#allocation8 + $0x38] sm:$0xff]
          %v460 = vld [vmem:[#allocation8 + $0x40] sm:$0xff]
          %v461 = vld [vmem:[#allocation8 + $0x48] sm:$0xff]
          %v462 = vld [vmem:[#allocation8 + $0x50] sm:$0xff]
          %v463 = vld [vmem:[#allocation8 + $0x58] sm:$0xff]
          %v464 = vld [vmem:[#allocation8 + $0x60] sm:$0xff]
          %v465 = vld [vmem:[#allocation8 + $0x68] sm:$0xff]
          %v466 = vld [vmem:[#allocation8 + $0x70] sm:$0xff]
          %v467 = vld [vmem:[#allocation8 + $0x78] sm:$0xff]
          %468 = vmatpush.msra.mxu0 %v467
          %469 = vmatpush.msra.mxu0 %v466
          %470 = vmatpush.msra.mxu0 %v465
          %471 = vmatpush.msra.mxu0 %v464
          %472 = vmatpush.msra.mxu0 %v463
          %473 = vmatpush.msra.mxu0 %v462
          %474 = vmatpush.msra.mxu0 %v461
          %475 = vmatpush.msra.mxu0 %v460
          %476 = vmatpush.msra.mxu0 %v459
          %477 = vmatpush.msra.mxu0 %v458
          %478 = vmatpush.msra.mxu0 %v457
          %479 = vmatpush.msra.mxu0 %v456
          %480 = vmatpush.msra.mxu0 %v455
          %481 = vmatpush.msra.mxu0 %v454
          %482 = vmatpush.msra.mxu0 %v453
          %483 = vmatpush.msra.mxu0 %v452
          %484 = vmatmul.f32.gmra.mxu0 %v451
          %v485 = vpop.f32.mrf.mxu0
          %v486 = vadd.f32 0.0, %v485
          %487 = vdwg.mxu0
          %v488 = vmul.f32 %v451, %v451
          %489 = vadd.xlane.f32.xlu0 %v488
          %v490 = vpop.xlane.xlu0 %489
          %v491 = vmax.f32 %v490, 1e-24
          %v492 = vrsqrt.pop %v491
          %v493 = vmul.f32 %v492, %v491
          %v494 = vmul.f32 %v493, %v492
          %v495 = vmul.f32 0.5, %v494
          %v496 = vsub.f32 1.5, %v495
          %v497 = vmul.f32 %v492, %v496
          %vm498 = vweird.f32 %v491
          %vm499 = vweird.f32 %v492
          %vm500 = vmor %vm498, %vm499
          %v501 = vsel %vm500, %v492, %v497
          %v502 = vmul.f32 %v486, %v501
          %503 = vst [vmem:[#allocation9] sm:$0xff] %v502
        $region56: #{tpu_custom_call.1} parent=35 // pred_fallthru
          _
        // Predicated region
        $region57: #{tpu_custom_call.1} parent=35 // pred_check
          %p504 = pneg %p148
        $region58: #{tpu_custom_call.1} parent=35 // pred_check_branch
          %506 = sbr.rel (%p504) target = $region60
        $region59: #{tpu_custom_call.1} parent=35 // pred_region
          %508 = vsyncadd [#allocation5], 0
          %s509 = smul.addr %s26, 8
          %s510 = scalar_lea.hbm %s4, %s509
          %s512 = sshll.u32 [#allocation9], 4
          %s513 = int_to_ptr.vmem [resolvable:$true] %s512
          %s514 = sshll.u32 %s510, 4
          %s515 = int_to_ptr.hbm [resolvable:$true] %s514
          %517 = dma.vmem_to_hbm [thread:$0]  %s513, 128, %s515, [#allocation5]
        $region60: #{tpu_custom_call.1} parent=35 // pred_fallthru
          _
        // Predicated region
        $region61: #{tpu_custom_call.1} parent=35 // pred_check
          %p518 = pneg %p148
        $region62: #{tpu_custom_call.1} parent=35 // pred_check_branch
          %520 = sbr.rel (%p518) target = $region64
        $region63: #{tpu_custom_call.1} parent=35 // pred_region
          %522 = dma.done [#allocation5], 128
        $region64: #{tpu_custom_call.1} parent=35 // pred_fallthru
          _
      $region36: #{tpu_custom_call.1} parent=5 // pred_fallthru
        _
      %p523 = scmp.le.s32.totalorder 2, %s17
      // Predicated region
      $region65: #{tpu_custom_call.1} parent=5 // pred_check
        %p524 = pneg %p523
      $region66: #{tpu_custom_call.1} parent=5 // pred_check_branch
        %526 = sbr.rel (%p524) target = $region68
      $region67: #{tpu_custom_call.1} parent=5 // pred_region
        %s527 = ssub.s32 %s17, 2
      $region68: #{tpu_custom_call.1} parent=5 // pred_fallthru
        _
    $region6: #{tpu_custom_call.1} parent=1 // loop_footer
      %s21 = sadd.s32 1, %s17
    $region7: #{tpu_custom_call.1} parent=1 // loop_footer_branch
      %16 = sbr.rel target = $region3
    $region8: #{tpu_custom_call.1} parent=1 // loop_exit
      _
    %528 = vsyncpa [#allocation4], 1
    %s529 = scalar_lea.sflag [#allocation4], 1
    %530 = vsyncpa %s529, 1
    %531 = vsyncpa [#allocation7], 1
    %s532 = scalar_lea.sflag [#allocation7], 1
    %533 = vsyncpa %s532, 1
    %534 = vsyncpa [#allocation5], 1
    %s535 = scalar_lea.sflag [#allocation5], 1
    %536 = vsyncpa %s535, 1

</llo_original>
